<compile_context>
chip_gen: v7x
topology: tpu7x:2x2x1
jax: 0.10.0
libtpu: 0.0.40
codegen_flags: <defaults>
</compile_context>

<pallas_src>
import numpy as np
import jax
import jax.numpy as jnp
from jax import lax
from jax.experimental import pallas as pl
from jax.experimental.pallas import tpu as pltpu


# ----------------------- stage 1: recommendation heads ------------------------
def _hgn_rec_kernel(seq_ref, usr_ref, cnt_ref, g1t_ref, g2t_ref, g2b_ref,
                    g3t_ref, g4t_ref, rec_ref,
                    u2_ref, u4_ref, acc_rep_ref, acc_seq_ref):
    # seq_ref : (TB, TL, D) f32   V[item_seq] chunk (padded rows are zero)
    # usr_ref : (TB, D)     f32   U[user]
    # cnt_ref : (TB, 1)     f32   #non-pad items per user
    # g*_ref  :                   pre-transposed weights (compute dtype), g2 bias f32
    # rec_ref : (TB, D)     cd    output: per-user rec head (compute dtype)
    # scratch : u2/u4 user-gate pre-activations, acc_rep/acc_seq L-reductions (f32)
    cd = g1t_ref.dtype
    l = pl.program_id(1)

    @pl.when(l == 0)
    def _init():
        usr = usr_ref[...]
        u2_ref[...] = jnp.dot(usr.astype(cd), g2t_ref[...],
                              preferred_element_type=jnp.float32) + g2b_ref[...]
        u4_ref[...] = jnp.dot(usr.astype(cd), g4t_ref[...],
                              preferred_element_type=jnp.float32)
        acc_rep_ref[...] = jnp.zeros_like(acc_rep_ref)
        acc_seq_ref[...] = jnp.zeros_like(acc_seq_ref)

    TB, TL, D = seq_ref.shape
    seq = seq_ref[...]                                        # (TB, TL, D) f32
    seq2d = seq.reshape(TB * TL, D)

    # feature gate (one big MXU matmul per chunk)
    g1_seq = jnp.dot(seq2d.astype(cd), g1t_ref[...],
                     preferred_element_type=jnp.float32).reshape(TB, TL, D)
    f_seq = seq * jax.nn.sigmoid(g1_seq + u2_ref[...][:, None, :])

    # instance gate
    g3_f = jnp.dot(f_seq.reshape(TB * TL, D).astype(cd), g3t_ref[...],
                   preferred_element_type=jnp.float32).reshape(TB, TL, D)
    seq_rep = f_seq * jax.nn.sigmoid(g3_f + u4_ref[...][:, None, :])

    # eval path only needs the last cumsum entry -> accumulate plain sums over L
    acc_rep_ref[...] += jnp.sum(seq_rep, axis=1)
    acc_seq_ref[...] += jnp.sum(seq, axis=1)

    @pl.when(l == pl.num_programs(1) - 1)
    def _finalize():
        inv_cnt = pl.reciprocal(cnt_ref[...] + 1.0, approx=True)   # (TB,1) EUP
        rec = usr_ref[...] + acc_rep_ref[...] * inv_cnt + acc_seq_ref[...]
        rec_ref[...] = rec.astype(rec_ref.dtype)


# ------------------------------ stage 2: scoring -----------------------------
def _hgn_score_kernel(rec_ref, tgtT_ref, out_ref):
    # rec_ref : (TB, D)  cd   cached rec heads
    # tgtT_ref: (D, TN)  cd   candidate embeddings, pre-transposed (lane-dense)
    # out_ref : (TB, TN) f32  scores
    out_ref[...] = jnp.dot(rec_ref[...], tgtT_ref[...],
                           preferred_element_type=jnp.float32)


# --------------------------------- wrapper ------------------------------------
def _round_up(x, m):
    return (x + m - 1) // m * m


def _vmem_info():
    try:
        cap = int(getattr(pltpu.get_tpu_info(), "vmem_capacity_bytes", 64 << 20))
    except Exception:
        cap = 64 << 20
    ceiling = min(int(cap * 0.6), 100 << 20)
    return ceiling, cap


def hgn_forward(user_indices, item_seq_indices, target_item_indices, params,
                *, compute_dtype=jnp.float32, tb=None, tl=None, tn=None):
    """Eval-mode HGN forward: scores (B, N) of each user against N candidates.

    user_indices        : (B,)   int32
    item_seq_indices    : (B, L) int32 (0 == padding)
    target_item_indices : (N, 1) int32
    compute_dtype       : MXU operand dtype (f32 or bf16); accumulation is f32.
    """
    U, V = params["U"], params["V"]
    B, L = item_seq_indices.shape
    N = target_item_indices.shape[0]
    D = U.shape[1]
    cdb = np.dtype(compute_dtype).itemsize
    ceiling, vmem_cap = _vmem_info()

    # ---- tile sizes ----------------------------------------------------------
    if tb is None:
        tb = min(128, _round_up(B, 8))
        # keep >=2 B tiles when B allows, so v7x's second TensorCore has work
        if B > 8 and _round_up(B, tb) == tb:
            tb = _round_up((B + 1) // 2, 8)
    Bp = _round_up(B, tb)
    if tl is None:
        tl = min(32, _round_up(L, 8))          # L-chunk for the gating stack
    Lp = _round_up(L, tl)
    if tn is None:
        tn = 2048 if vmem_cap >= (100 << 20) else 1024   # v5e/v6e vs v7x
    tn = min(tn, _round_up(N, 128))            # lane-dense candidate / out tiles
    Np = _round_up(N, tn)

    # ---- glue (plain JAX): gathers, padding, weight prep ---------------------
    idx = jnp.pad(item_seq_indices.astype(jnp.int32), ((0, Bp - B), (0, Lp - L)))
    # mask padded positions explicitly (do not rely on V[0] == 0)
    seq_ebd = jnp.where((idx != 0)[..., None], V[idx], 0.0)            # (Bp,Lp,D)
    usr_ebd = U[jnp.pad(user_indices.astype(jnp.int32), (0, Bp - B))]  # (Bp, D)
    cnt = jnp.sum(idx != 0, axis=1, keepdims=True).astype(jnp.float32)  # (Bp, 1)
    tgt_idx = jnp.pad(target_item_indices[:, 0].astype(jnp.int32), (0, Np - N))
    tgtT = V[tgt_idx].astype(compute_dtype).T                           # (D, Np)

    g1t = params["g1_w"].T.astype(compute_dtype)
    g2t = params["g2_w"].T.astype(compute_dtype)
    g2b = params["g2_b"].reshape(1, D).astype(jnp.float32)
    g3t = params["g3_w"].T.astype(compute_dtype)
    g4t = params["g4_w"].T.astype(compute_dtype)

    # ---- stage 1: rec heads (grid over B tiles x L chunks) -------------------
    est1 = (2 * (tb * tl * D * 4 + tb * D * 4 + tb * 128 * 4 + tb * D * cdb)
            + 2 * (4 * D * D * cdb + 8 * 128 * 4)
            + 4 * tb * D * 4
            + 8 * tb * tl * D * 4)              # headroom for in-flight chunk temps
    vmem1 = int(min(max(2 * est1, 16 << 20), ceiling))

    rec = pl.pallas_call(
        _hgn_rec_kernel,
        out_shape=jax.ShapeDtypeStruct((Bp, D), compute_dtype),
        grid=(Bp // tb, Lp // tl),
        in_specs=[
            pl.BlockSpec((tb, tl, D), lambda i, l: (i, l, 0)),   # seq chunk
            pl.BlockSpec((tb, D), lambda i, l: (i, 0)),          # usr
            pl.BlockSpec((tb, 1), lambda i, l: (i, 0)),          # cnt
            pl.BlockSpec((D, D), lambda i, l: (0, 0)),           # g1t
            pl.BlockSpec((D, D), lambda i, l: (0, 0)),           # g2t
            pl.BlockSpec((1, D), lambda i, l: (0, 0)),           # g2b
            pl.BlockSpec((D, D), lambda i, l: (0, 0)),           # g3t
            pl.BlockSpec((D, D), lambda i, l: (0, 0)),           # g4t
        ],
        out_specs=pl.BlockSpec((tb, D), lambda i, l: (i, 0)),
        scratch_shapes=[pltpu.VMEM((tb, D), jnp.float32)] * 4,   # u2, u4, rep, seq
        compiler_params=pltpu.CompilerParams(
            dimension_semantics=("parallel", "arbitrary"),
            vmem_limit_bytes=vmem1),
    )(seq_ebd, usr_ebd, cnt, g1t, g2t, g2b, g3t, g4t)

    # ---- stage 2: scoring (candidate table streamed from HBM exactly once) ---
    # grid = (N tiles outer, B tiles inner); candidate index_map depends only on
    # the outer axis, so its block stays resident across all inner B tiles.
    est2 = 2 * (D * tn * cdb + tb * D * cdb + tb * tn * 4) + 4 * tb * tn * 4
    vmem2 = int(min(max(2 * est2, 16 << 20), ceiling))

    out = pl.pallas_call(
        _hgn_score_kernel,
        out_shape=jax.ShapeDtypeStruct((Bp, Np), jnp.float32),
        grid=(Np // tn, Bp // tb),
        in_specs=[
            pl.BlockSpec((tb, D), lambda j, i: (i, 0)),          # rec heads
            pl.BlockSpec((D, tn), lambda j, i: (0, j)),          # candidate tile
        ],
        out_specs=pl.BlockSpec((tb, tn), lambda j, i: (i, j)),
        compiler_params=pltpu.CompilerParams(
            dimension_semantics=("parallel", "arbitrary"),
            vmem_limit_bytes=vmem2),
    )(rec, tgtT)

    return out[:B, :N]


# ----------------------------- pure-JAX reference ----------------------------
def hgn_ref(user_indices, item_seq_indices, target_item_indices, p):
    seq_ebd = p["V"][item_seq_indices]                  # (B, L, D)
    usr_ebd = p["U"][user_indices][:, None, :]          # (B, 1, D)
    tgt_ebd = p["V"][target_item_indices]               # (N, 1, D)

    g1 = lambda x: x @ p["g1_w"].T
    g2 = lambda x: x @ p["g2_w"].T + p["g2_b"]
    g3 = lambda x: x @ p["g3_w"].T
    g4 = lambda x: x @ p["g4_w"].T

    f_seq = seq_ebd * jax.nn.sigmoid(g1(seq_ebd) + g2(usr_ebd))
    seq_rep = f_seq * jax.nn.sigmoid(g3(f_seq) + g4(usr_ebd))
    cnt = jnp.cumsum((item_seq_indices != 0).astype(jnp.float32), axis=1)[..., None]
    rec = usr_ebd + jnp.cumsum(seq_rep, axis=1) / (cnt + 1.0) + jnp.cumsum(seq_ebd, axis=1)
    return rec[:, -1, :] @ tgt_ebd[:, 0, :].T           # (B, N)


# --------------------------------- main ---------------------------------------
if __name__ == "__main__":
    # small, module-consistent sizes
    num_seqs, num_items = 16, 64
    B, L, D, N = 4, 8, 32, 16

    key = jax.random.PRNGKey(0)
    k = jax.random.split(key, 10)

    # deterministic synthetic parameters (shapes from HGN.__init__)
    U = jax.random.normal(k[0], (num_seqs, D), jnp.float32) / D
    V = jax.random.normal(k[1], (num_items, D), jnp.float32) / D
    V = V.at[0].set(0.0)                                 # padding_idx = 0
    bound = 1.0 / np.sqrt(D)
    params = {
        "U": U,
        "V": V,
        "g1_w": jax.random.uniform(k[2], (D, D), jnp.float32, -bound, bound),
        "g2_w": jax.random.uniform(k[3], (D, D), jnp.float32, -bound, bound),
        "g2_b": jax.random.uniform(k[4], (D,), jnp.float32, -bound, bound),
        "g3_w": jax.random.uniform(k[5], (D, D), jnp.float32, -bound, bound),
        "g4_w": jax.random.uniform(k[6], (D, D), jnp.float32, -bound, bound),
    }

    # deterministic inputs
    user_indices = jax.random.randint(k[7], (B,), 0, num_seqs, jnp.int32)
    item_seq_indices = jax.random.randint(k[8], (B, L), 0, num_items, jnp.int32)
    item_seq_indices = item_seq_indices.at[0, :3].set(0)     # exercise padding mask
    target_item_indices = jax.random.randint(k[9], (N, 1), 1, num_items, jnp.int32)

    ref = hgn_ref(user_indices, item_seq_indices, target_item_indices, params)

    # f32 MXU operands (tolerance slightly relaxed for the approx EUP reciprocal)
    out = hgn_forward(user_indices, item_seq_indices, target_item_indices, params)
    out = jax.block_until_ready(out)
    np.testing.assert_allclose(np.asarray(out), np.asarray(ref),
                               rtol=1e-3, atol=2e-5)

    # bf16 MXU operands (weights + candidate table + dot inputs), f32 accumulation
    out_bf16 = hgn_forward(user_indices, item_seq_indices, target_item_indices,
                           params, compute_dtype=jnp.bfloat16)
    out_bf16 = jax.block_until_ready(out_bf16)
    np.testing.assert_allclose(np.asarray(out_bf16), np.asarray(ref),
                               rtol=3e-2, atol=3e-3)

    print("KERNEL_OK")
</pallas_src>

<mosaic_0001>
module attributes {stable_mosaic.version = 11 : i64} {
  func.func @_hgn_rec_kernel(%arg0: i32, %arg1: i32, %arg2: memref<8x8x32xf32, #tpu.memory_space<vmem>>, %arg3: memref<8x32xf32, #tpu.memory_space<vmem>>, %arg4: memref<8x1xf32, #tpu.memory_space<vmem>>, %arg5: memref<32x32xf32, #tpu.memory_space<vmem>>, %arg6: memref<32x32xf32, #tpu.memory_space<vmem>>, %arg7: memref<1x32xf32, #tpu.memory_space<vmem>>, %arg8: memref<32x32xf32, #tpu.memory_space<vmem>>, %arg9: memref<32x32xf32, #tpu.memory_space<vmem>>, %arg10: memref<8x32xf32, #tpu.memory_space<vmem>>, %arg11: memref<8x32xf32, #tpu.memory_space<vmem>>, %arg12: memref<8x32xf32, #tpu.memory_space<vmem>>, %arg13: memref<8x32xf32, #tpu.memory_space<vmem>>, %arg14: memref<8x32xf32, #tpu.memory_space<vmem>>) attributes {dimension_semantics = [#tpu.dimension_semantics<parallel>, #tpu.dimension_semantics<arbitrary>], iteration_bounds = array<i64: 1, 1>, scalar_prefetch = 0 : i64, scratch_operands = 4 : i64, tpu.core_type = #tpu.core_type<tc>, window_params = [{transform_indices = @transform_0, window_bounds = array<i64: 8, 8, 32>}, {transform_indices = @transform_1, window_bounds = array<i64: 8, 32>}, {transform_indices = @transform_2, window_bounds = array<i64: 8, 1>}, {pipeline_mode = #tpu.pipeline_mode<synchronous>, transform_indices = @transform_3, window_bounds = array<i64: 32, 32>}, {pipeline_mode = #tpu.pipeline_mode<synchronous>, transform_indices = @transform_4, window_bounds = array<i64: 32, 32>}, {pipeline_mode = #tpu.pipeline_mode<synchronous>, transform_indices = @transform_5, window_bounds = array<i64: 1, 32>}, {pipeline_mode = #tpu.pipeline_mode<synchronous>, transform_indices = @transform_6, window_bounds = array<i64: 32, 32>}, {pipeline_mode = #tpu.pipeline_mode<synchronous>, transform_indices = @transform_7, window_bounds = array<i64: 32, 32>}, {transform_indices = @transform_8, window_bounds = array<i64: 8, 32>}]} {
    %c0_i32 = arith.constant 0 : i32
    %0 = arith.cmpi eq, %arg1, %c0_i32 : i32
    %1 = arith.extui %0 : i1 to i32
    %c0_i32_0 = arith.constant 0 : i32
    %2 = arith.cmpi ne, %1, %c0_i32_0 : i32
    scf.if %2 {
      %c0_26 = arith.constant 0 : index
      %c0_27 = arith.constant 0 : index
      %43 = vector.load %arg3[%c0_26, %c0_27] : memref<8x32xf32, #tpu.memory_space<vmem>>, vector<8x32xf32>
      %c0_28 = arith.constant 0 : index
      %c0_29 = arith.constant 0 : index
      %44 = vector.load %arg6[%c0_28, %c0_29] : memref<32x32xf32, #tpu.memory_space<vmem>>, vector<32x32xf32>
      %cst_30 = arith.constant dense<0.000000e+00> : vector<8x32xf32>
      %45 = tpu.matmul %43, %44, %cst_30 {dimension_numbers = #tpu.dot_dimension_numbers<[1], [0], [0], [1], [0, 0, 1, 1], [], []>} : vector<8x32xf32>, vector<32x32xf32>, vector<8x32xf32> -> vector<8x32xf32>
      %c0_31 = arith.constant 0 : index
      %c0_32 = arith.constant 0 : index
      %46 = vector.load %arg7[%c0_31, %c0_32] : memref<1x32xf32, #tpu.memory_space<vmem>>, vector<1x32xf32>
      %47 = vector.broadcast %46 : vector<1x32xf32> to vector<8x32xf32>
      %48 = arith.addf %45, %47 : vector<8x32xf32>
      %c0_33 = arith.constant 0 : index
      %c0_34 = arith.constant 0 : index
      %49 = vector.load %arg11[%c0_33, %c0_34] : memref<8x32xf32, #tpu.memory_space<vmem>>, vector<8x32xf32>
      tpu.vector_store %arg11[%c0_33, %c0_34], %48 {strides = array<i32>} : memref<8x32xf32, #tpu.memory_space<vmem>>, vector<8x32xf32>,
      %c0_35 = arith.constant 0 : index
      %c0_36 = arith.constant 0 : index
      %50 = vector.load %arg9[%c0_35, %c0_36] : memref<32x32xf32, #tpu.memory_space<vmem>>, vector<32x32xf32>
      %cst_37 = arith.constant dense<0.000000e+00> : vector<8x32xf32>
      %51 = tpu.matmul %43, %50, %cst_37 {dimension_numbers = #tpu.dot_dimension_numbers<[1], [0], [0], [1], [0, 0, 1, 1], [], []>} : vector<8x32xf32>, vector<32x32xf32>, vector<8x32xf32> -> vector<8x32xf32>
      %c0_38 = arith.constant 0 : index
      %c0_39 = arith.constant 0 : index
      %52 = vector.load %arg12[%c0_38, %c0_39] : memref<8x32xf32, #tpu.memory_space<vmem>>, vector<8x32xf32>
      tpu.vector_store %arg12[%c0_38, %c0_39], %51 {strides = array<i32>} : memref<8x32xf32, #tpu.memory_space<vmem>>, vector<8x32xf32>,
      %cst_40 = arith.constant 0.000000e+00 : f32
      %53 = vector.broadcast %cst_40 : f32 to vector<8x32xf32>
      %c0_41 = arith.constant 0 : index
      %c0_42 = arith.constant 0 : index
      %54 = vector.load %arg13[%c0_41, %c0_42] : memref<8x32xf32, #tpu.memory_space<vmem>>, vector<8x32xf32>
      tpu.vector_store %arg13[%c0_41, %c0_42], %53 {strides = array<i32>} : memref<8x32xf32, #tpu.memory_space<vmem>>, vector<8x32xf32>,
      %cst_43 = arith.constant 0.000000e+00 : f32
      %55 = vector.broadcast %cst_43 : f32 to vector<8x32xf32>
      %c0_44 = arith.constant 0 : index
      %c0_45 = arith.constant 0 : index
      %56 = vector.load %arg14[%c0_44, %c0_45] : memref<8x32xf32, #tpu.memory_space<vmem>>, vector<8x32xf32>
      tpu.vector_store %arg14[%c0_44, %c0_45], %55 {strides = array<i32>} : memref<8x32xf32, #tpu.memory_space<vmem>>, vector<8x32xf32>,
    } else {
    }
    %c0 = arith.constant 0 : index
    %c0_1 = arith.constant 0 : index
    %c0_2 = arith.constant 0 : index
    %3 = vector.load %arg2[%c0, %c0_1, %c0_2] : memref<8x8x32xf32, #tpu.memory_space<vmem>>, vector<8x8x32xf32>
    %4 = vector.shape_cast %3 : vector<8x8x32xf32> to vector<64x32xf32>
    %c0_3 = arith.constant 0 : index
    %c0_4 = arith.constant 0 : index
    %5 = vector.load %arg5[%c0_3, %c0_4] : memref<32x32xf32, #tpu.memory_space<vmem>>, vector<32x32xf32>
    %cst = arith.constant dense<0.000000e+00> : vector<64x32xf32>
    %6 = tpu.matmul %4, %5, %cst {dimension_numbers = #tpu.dot_dimension_numbers<[1], [0], [0], [1], [0, 0, 1, 1], [], []>} : vector<64x32xf32>, vector<32x32xf32>, vector<64x32xf32> -> vector<64x32xf32>
    %7 = vector.shape_cast %6 : vector<64x32xf32> to vector<8x8x32xf32>
    %c0_5 = arith.constant 0 : index
    %c0_6 = arith.constant 0 : index
    %8 = vector.load %arg11[%c0_5, %c0_6] : memref<8x32xf32, #tpu.memory_space<vmem>>, vector<8x32xf32>
    %9 = vector.shape_cast %8 : vector<8x32xf32> to vector<8x1x32xf32>
    %10 = vector.broadcast %9 : vector<8x1x32xf32> to vector<8x8x32xf32>
    %11 = arith.addf %7, %10 : vector<8x8x32xf32>
    %12 = arith.negf %11 : vector<8x8x32xf32>
    %13 = math.exp %12 : vector<8x8x32xf32>
    %cst_7 = arith.constant 1.000000e+00 : f32
    %14 = vector.broadcast %cst_7 : f32 to vector<8x8x32xf32>
    %15 = arith.addf %14, %13 : vector<8x8x32xf32>
    %16 = arith.divf %14, %15 : vector<8x8x32xf32>
    %17 = arith.mulf %3, %16 : vector<8x8x32xf32>
    %18 = vector.shape_cast %17 : vector<8x8x32xf32> to vector<64x32xf32>
    %c0_8 = arith.constant 0 : index
    %c0_9 = arith.constant 0 : index
    %19 = vector.load %arg8[%c0_8, %c0_9] : memref<32x32xf32, #tpu.memory_space<vmem>>, vector<32x32xf32>
    %cst_10 = arith.constant dense<0.000000e+00> : vector<64x32xf32>
    %20 = tpu.matmul %18, %19, %cst_10 {dimension_numbers = #tpu.dot_dimension_numbers<[1], [0], [0], [1], [0, 0, 1, 1], [], []>} : vector<64x32xf32>, vector<32x32xf32>, vector<64x32xf32> -> vector<64x32xf32>
    %21 = vector.shape_cast %20 : vector<64x32xf32> to vector<8x8x32xf32>
    %c0_11 = arith.constant 0 : index
    %c0_12 = arith.constant 0 : index
    %22 = vector.load %arg12[%c0_11, %c0_12] : memref<8x32xf32, #tpu.memory_space<vmem>>, vector<8x32xf32>
    %23 = vector.shape_cast %22 : vector<8x32xf32> to vector<8x1x32xf32>
    %24 = vector.broadcast %23 : vector<8x1x32xf32> to vector<8x8x32xf32>
    %25 = arith.addf %21, %24 : vector<8x8x32xf32>
    %26 = arith.negf %25 : vector<8x8x32xf32>
    %27 = math.exp %26 : vector<8x8x32xf32>
    %cst_13 = arith.constant 1.000000e+00 : f32
    %28 = vector.broadcast %cst_13 : f32 to vector<8x8x32xf32>
    %29 = arith.addf %28, %27 : vector<8x8x32xf32>
    %30 = arith.divf %28, %29 : vector<8x8x32xf32>
    %31 = arith.mulf %17, %30 : vector<8x8x32xf32>
    %c0_14 = arith.constant 0 : index
    %c0_15 = arith.constant 0 : index
    %32 = vector.load %arg13[%c0_14, %c0_15] : memref<8x32xf32, #tpu.memory_space<vmem>>, vector<8x32xf32>
    %cst_16 = arith.constant dense<0.000000e+00> : vector<8x32xf32>
    %33 = vector.multi_reduction <add>, %31, %cst_16 [1] : vector<8x8x32xf32> to vector<8x32xf32>
    %34 = arith.addf %32, %33 : vector<8x32xf32>
    %c0_17 = arith.constant 0 : index
    %c0_18 = arith.constant 0 : index
    %35 = vector.load %arg13[%c0_17, %c0_18] : memref<8x32xf32, #tpu.memory_space<vmem>>, vector<8x32xf32>
    tpu.vector_store %arg13[%c0_17, %c0_18], %34 {strides = array<i32>} : memref<8x32xf32, #tpu.memory_space<vmem>>, vector<8x32xf32>,
    %c0_19 = arith.constant 0 : index
    %c0_20 = arith.constant 0 : index
    %36 = vector.load %arg14[%c0_19, %c0_20] : memref<8x32xf32, #tpu.memory_space<vmem>>, vector<8x32xf32>
    %cst_21 = arith.constant dense<0.000000e+00> : vector<8x32xf32>
    %37 = vector.multi_reduction <add>, %3, %cst_21 [1] : vector<8x8x32xf32> to vector<8x32xf32>
    %38 = arith.addf %36, %37 : vector<8x32xf32>
    %c0_22 = arith.constant 0 : index
    %c0_23 = arith.constant 0 : index
    %39 = vector.load %arg14[%c0_22, %c0_23] : memref<8x32xf32, #tpu.memory_space<vmem>>, vector<8x32xf32>
    tpu.vector_store %arg14[%c0_22, %c0_23], %38 {strides = array<i32>} : memref<8x32xf32, #tpu.memory_space<vmem>>, vector<8x32xf32>,
    %c0_i32_24 = arith.constant 0 : i32
    %40 = arith.cmpi eq, %arg1, %c0_i32_24 : i32
    %41 = arith.extui %40 : i1 to i32
    %c0_i32_25 = arith.constant 0 : i32
    %42 = arith.cmpi ne, %41, %c0_i32_25 : i32
    scf.if %42 {
      %c0_26 = arith.constant 0 : index
      %c0_27 = arith.constant 0 : index
      %43 = vector.load %arg4[%c0_26, %c0_27] : memref<8x1xf32, #tpu.memory_space<vmem>>, vector<8x1xf32>
      %cst_28 = arith.constant 1.000000e+00 : f32
      %44 = vector.broadcast %cst_28 : f32 to vector<8x1xf32>
      %45 = arith.addf %43, %44 : vector<8x1xf32>
      %46 = tpu.reciprocal %45 {approx = true} : vector<8x1xf32> -> vector<8x1xf32>
      %c0_29 = arith.constant 0 : index
      %c0_30 = arith.constant 0 : index
      %47 = vector.load %arg3[%c0_29, %c0_30] : memref<8x32xf32, #tpu.memory_space<vmem>>, vector<8x32xf32>
      %c0_31 = arith.constant 0 : index
      %c0_32 = arith.constant 0 : index
      %48 = vector.load %arg13[%c0_31, %c0_32] : memref<8x32xf32, #tpu.memory_space<vmem>>, vector<8x32xf32>
      %49 = vector.broadcast %46 : vector<8x1xf32> to vector<8x32xf32>
      %50 = arith.mulf %48, %49 : vector<8x32xf32>
      %51 = arith.addf %47, %50 : vector<8x32xf32>
      %c0_33 = arith.constant 0 : index
      %c0_34 = arith.constant 0 : index
      %52 = vector.load %arg14[%c0_33, %c0_34] : memref<8x32xf32, #tpu.memory_space<vmem>>, vector<8x32xf32>
      %53 = arith.addf %51, %52 : vector<8x32xf32>
      %c0_35 = arith.constant 0 : index
      %c0_36 = arith.constant 0 : index
      %54 = vector.load %arg10[%c0_35, %c0_36] : memref<8x32xf32, #tpu.memory_space<vmem>>, vector<8x32xf32>
      tpu.vector_store %arg10[%c0_35, %c0_36], %53 {strides = array<i32>} : memref<8x32xf32, #tpu.memory_space<vmem>>, vector<8x32xf32>,
    } else {
    }
    return
  }
  func.func @transform_0(%arg0: i32, %arg1: i32) -> (i32, i32, i32) {
    %c0_i32 = arith.constant 0 : i32
    %c0_i32_0 = arith.constant 0 : i32
    return %arg0, %arg1, %c0_i32 : i32, i32, i32
  }
  func.func @transform_1(%arg0: i32, %arg1: i32) -> (i32, i32) {
    %c0_i32 = arith.constant 0 : i32
    %c0_i32_0 = arith.constant 0 : i32
    return %arg0, %c0_i32 : i32, i32
  }
  func.func @transform_2(%arg0: i32, %arg1: i32) -> (i32, i32) {
    %c0_i32 = arith.constant 0 : i32
    %c0_i32_0 = arith.constant 0 : i32
    return %arg0, %c0_i32 : i32, i32
  }
  func.func @transform_3(%arg0: i32, %arg1: i32) -> (i32, i32) {
    %c0_i32 = arith.constant 0 : i32
    %c0_i32_0 = arith.constant 0 : i32
    %c0_i32_1 = arith.constant 0 : i32
    return %c0_i32, %c0_i32_0 : i32, i32
  }
  func.func @transform_4(%arg0: i32, %arg1: i32) -> (i32, i32) {
    %c0_i32 = arith.constant 0 : i32
    %c0_i32_0 = arith.constant 0 : i32
    %c0_i32_1 = arith.constant 0 : i32
    return %c0_i32, %c0_i32_0 : i32, i32
  }
  func.func @transform_5(%arg0: i32, %arg1: i32) -> (i32, i32) {
    %c0_i32 = arith.constant 0 : i32
    %c0_i32_0 = arith.constant 0 : i32
    %c0_i32_1 = arith.constant 0 : i32
    return %c0_i32, %c0_i32_0 : i32, i32
  }
  func.func @transform_6(%arg0: i32, %arg1: i32) -> (i32, i32) {
    %c0_i32 = arith.constant 0 : i32
    %c0_i32_0 = arith.constant 0 : i32
    %c0_i32_1 = arith.constant 0 : i32
    return %c0_i32, %c0_i32_0 : i32, i32
  }
  func.func @transform_7(%arg0: i32, %arg1: i32) -> (i32, i32) {
    %c0_i32 = arith.constant 0 : i32
    %c0_i32_0 = arith.constant 0 : i32
    %c0_i32_1 = arith.constant 0 : i32
    return %c0_i32, %c0_i32_0 : i32, i32
  }
  func.func @transform_8(%arg0: i32, %arg1: i32) -> (i32, i32) {
    %c0_i32 = arith.constant 0 : i32
    %c0_i32_0 = arith.constant 0 : i32
    return %arg0, %c0_i32 : i32, i32
  }
}

</mosaic_0001>

<llo_original>
// kernel: tpu_custom_call.1
$region0: #{tpu_custom_call.1}
  #allocation0 [shape = 'u32[]', space=smem, size = 0x4, offset = 0x4, fixed_abs, tag = 'smem constant byte address 0x4 - core index']
  #allocation1 [shape = 'u32[144,128]{1,0:T(1,128)}', space=vmem, size = 0x12000, scoped, tag = 'internal scratch']
  #allocation2 [shape = 'f32[8,32]{1,0:T(8,128)}', space=vmem, size = 0x1000, scoped, tag = 'scratch operand']
  #allocation3 [shape = 'f32[8,32]{1,0:T(8,128)}', space=vmem, size = 0x1000, scoped, tag = 'scratch operand']
  #allocation4 [shape = 'f32[8,32]{1,0:T(8,128)}', space=vmem, size = 0x1000, scoped, tag = 'scratch operand']
  #allocation5 [shape = 'f32[8,32]{1,0:T(8,128)}', space=vmem, size = 0x1000, scoped, tag = 'scratch operand']
  %s0 = inlined_call_operand.hbm [shape: f32[8,8,32], index: 0, kind: input, shape index: {}]
  %s1 = inlined_call_operand.hbm [shape: f32[8,32], index: 1, kind: input, shape index: {}]
  %s2 = inlined_call_operand.vmem [shape: f32[8,1], index: 2, kind: input, shape index: {}]
  %s3 = inlined_call_operand.hbm [shape: f32[32,32], index: 3, kind: input, shape index: {}]
  %s4 = inlined_call_operand.hbm [shape: f32[32,32], index: 4, kind: input, shape index: {}]
  %s5 = inlined_call_operand.vmem [shape: f32[1,32], index: 5, kind: input, shape index: {}]
  %s6 = inlined_call_operand.hbm [shape: f32[32,32], index: 6, kind: input, shape index: {}]
  %s7 = inlined_call_operand.vmem [shape: f32[32,32], index: 7, kind: input, shape index: {}]
  %s8 = inlined_call_operand.hbm [shape: f32[8,32], index: 8, kind: output, shape index: {}]
  %s9 = sld [smem:[#allocation0]]
  $region70: #{tpu_custom_call.1} parent=0
    _
  %s11 = ssub.s32 1, %s9
  %s12 = scalar_select 0, %s11, %s9
  $region1: #{tpu_custom_call.1} parent=0
    #allocation6 [shape = 'u8[32768]{0}', space=vmem, size = 0x8000, scoped, tag = 'input window, operand 0, single buffered']
    #allocation7 [shape = 's32[1]{0}', space=sflag, size = 0x4, scoped, tag = 'scoped memory for tpu_custom_call.1']
    #allocation8 [shape = 's32[1]{0}', space=sflag, size = 0x4, scoped, tag = 'scoped memory for tpu_custom_call.1']
    #allocation9 [shape = 'u8[4096]{0}', space=vmem, size = 0x1000, scoped, tag = 'input window, operand 1, single buffered']
    #allocation10 [shape = 's32[1]{0}', space=sflag, size = 0x4, scoped, tag = 'scoped memory for tpu_custom_call.1']
    #allocation11 [shape = 'u8[16384]{0}', space=vmem, size = 0x4000, scoped, tag = 'input window, operand 3, single buffered']
    #allocation12 [shape = 'u8[16384]{0}', space=vmem, size = 0x4000, scoped, tag = 'input window, operand 4, single buffered']
    #allocation13 [shape = 's32[1]{0}', space=sflag, size = 0x4, scoped, tag = 'scoped memory for tpu_custom_call.1']
    #allocation14 [shape = 'u8[16384]{0}', space=vmem, size = 0x4000, scoped, tag = 'input window, operand 6, single buffered']
    #allocation15 [shape = 'u8[4096]{0}', space=vmem, size = 0x1000, scoped, tag = 'output window, operand 0, single buffered']
    %13 = vsyncpa [#allocation7], 0
    %14 = vsyncpa [#allocation10], 0
    %15 = vsyncpa [#allocation13], 0
    %16 = vsyncpa [#allocation8], 0
    // Predicated region
    $region2: #{tpu_custom_call.1} parent=1 // pred_check
      _
    $region3: #{tpu_custom_call.1} parent=1 // pred_check_branch
      %18 = sbr.rel (0) target = $region5
    $region4: #{tpu_custom_call.1} parent=1 // pred_region
      %s20 = ssub.s32 1024, 1024
      %21 = vsyncadd [#allocation7], %s20
      %s22 = sshll.u32 [#allocation6], 4
      %s23 = int_to_ptr.vmem [resolvable:$true] %s22
      %28 = dma.hbm_to_vmem [thread:$0]  %s0, 1024, %s23, [#allocation7], 128, 128, 8
    $region5: #{tpu_custom_call.1} parent=1 // pred_fallthru
      _
    // Predicated region
    $region6: #{tpu_custom_call.1} parent=1 // pred_check
      _
    $region7: #{tpu_custom_call.1} parent=1 // pred_check_branch
      %30 = sbr.rel (0) target = $region9
    $region8: #{tpu_custom_call.1} parent=1 // pred_region
      %s32 = ssub.s32 128, 128
      %33 = vsyncadd [#allocation10], %s32
      %s35 = sshll.u32 [#allocation9], 4
      %s36 = int_to_ptr.vmem [resolvable:$true] %s35
      %38 = dma.hbm_to_vmem [thread:$0]  %s1, 128, %s36, [#allocation10]
    $region9: #{tpu_custom_call.1} parent=1 // pred_fallthru
      _
    // Predicated region
    $region10: #{tpu_custom_call.1} parent=1 // pred_check
      _
    $region11: #{tpu_custom_call.1} parent=1 // pred_check_branch
      %40 = sbr.rel (0) target = $region13
    $region12: #{tpu_custom_call.1} parent=1 // pred_region
      _
    $region13: #{tpu_custom_call.1} parent=1 // pred_fallthru
      _
    // Predicated region
    $region14: #{tpu_custom_call.1} parent=1 // pred_check
      _
    $region15: #{tpu_custom_call.1} parent=1 // pred_check_branch
      %42 = sbr.rel (0) target = $region17
    $region16: #{tpu_custom_call.1} parent=1 // pred_region
      %s44 = ssub.s32 512, 512
      %45 = vsyncadd [#allocation10], %s44
      %s46 = sshll.u32 [#allocation11], 4
      %s47 = int_to_ptr.vmem [resolvable:$true] %s46
      %52 = dma.hbm_to_vmem [thread:$0]  %s3, 512, %s47, [#allocation10], 128, 128, 8
    $region17: #{tpu_custom_call.1} parent=1 // pred_fallthru
      _
    // Predicated region
    $region18: #{tpu_custom_call.1} parent=1 // pred_check
      _
    $region19: #{tpu_custom_call.1} parent=1 // pred_check_branch
      %54 = sbr.rel (0) target = $region21
    $region20: #{tpu_custom_call.1} parent=1 // pred_region
      %s56 = ssub.s32 512, 512
      %57 = vsyncadd [#allocation13], %s56
      %s58 = sshll.u32 [#allocation12], 4
      %s59 = int_to_ptr.vmem [resolvable:$true] %s58
      %64 = dma.hbm_to_vmem [thread:$0]  %s4, 512, %s59, [#allocation13], 128, 128, 8
    $region21: #{tpu_custom_call.1} parent=1 // pred_fallthru
      _
    // Predicated region
    $region22: #{tpu_custom_call.1} parent=1 // pred_check
      _
    $region23: #{tpu_custom_call.1} parent=1 // pred_check_branch
      %66 = sbr.rel (0) target = $region25
    $region24: #{tpu_custom_call.1} parent=1 // pred_region
      _
    $region25: #{tpu_custom_call.1} parent=1 // pred_fallthru
      _
    // Predicated region
    $region26: #{tpu_custom_call.1} parent=1 // pred_check
      _
    $region27: #{tpu_custom_call.1} parent=1 // pred_check_branch
      %68 = sbr.rel (0) target = $region29
    $region28: #{tpu_custom_call.1} parent=1 // pred_region
      %s70 = ssub.s32 512, 512
      %71 = vsyncadd [#allocation13], %s70
      %s72 = sshll.u32 [#allocation14], 4
      %s73 = int_to_ptr.vmem [resolvable:$true] %s72
      %78 = dma.hbm_to_vmem [thread:$0]  %s6, 512, %s73, [#allocation13], 128, 128, 8
    $region29: #{tpu_custom_call.1} parent=1 // pred_fallthru
      _
    // Predicated region
    $region30: #{tpu_custom_call.1} parent=1 // pred_check
      _
    $region31: #{tpu_custom_call.1} parent=1 // pred_check_branch
      %80 = sbr.rel (0) target = $region33
    $region32: #{tpu_custom_call.1} parent=1 // pred_region
      _
    $region33: #{tpu_custom_call.1} parent=1 // pred_fallthru
      _
    // Predicated region
    $region34: #{tpu_custom_call.1} parent=1 // pred_check
      _
    $region35: #{tpu_custom_call.1} parent=1 // pred_check_branch
      %82 = sbr.rel (0) target = $region37
    $region36: #{tpu_custom_call.1} parent=1 // pred_region
      %83 = dma.done [#allocation7], 1024
    $region37: #{tpu_custom_call.1} parent=1 // pred_fallthru
      _
    // Predicated region
    $region38: #{tpu_custom_call.1} parent=1 // pred_check
      _
    $region39: #{tpu_custom_call.1} parent=1 // pred_check_branch
      %85 = sbr.rel (0) target = $region41
    $region40: #{tpu_custom_call.1} parent=1 // pred_region
      %86 = dma.done [#allocation10], 128
    $region41: #{tpu_custom_call.1} parent=1 // pred_fallthru
      _
    // Predicated region
    $region42: #{tpu_custom_call.1} parent=1 // pred_check
      _
    $region43: #{tpu_custom_call.1} parent=1 // pred_check_branch
      %88 = sbr.rel (0) target = $region45
    $region44: #{tpu_custom_call.1} parent=1 // pred_region
      %89 = dma.done [#allocation10], 512
    $region45: #{tpu_custom_call.1} parent=1 // pred_fallthru
      _
    // Predicated region
    $region46: #{tpu_custom_call.1} parent=1 // pred_check
      _
    $region47: #{tpu_custom_call.1} parent=1 // pred_check_branch
      %91 = sbr.rel (0) target = $region49
    $region48: #{tpu_custom_call.1} parent=1 // pred_region
      %92 = dma.done [#allocation13], 512
    $region49: #{tpu_custom_call.1} parent=1 // pred_fallthru
      _
    // Predicated region
    $region50: #{tpu_custom_call.1} parent=1 // pred_check
      _
    $region51: #{tpu_custom_call.1} parent=1 // pred_check_branch
      %94 = sbr.rel (0) target = $region53
    $region52: #{tpu_custom_call.1} parent=1 // pred_region
      %95 = dma.done [#allocation13], 512
    $region53: #{tpu_custom_call.1} parent=1 // pred_fallthru
      _
    %p96 = scmp.eq.s32.totalorder 0, 0
    // Predicated region
    $region54: #{tpu_custom_call.1} parent=1 // pred_check
      %p97 = pneg %p96
    $region55: #{tpu_custom_call.1} parent=1 // pred_check_branch
      %99 = sbr.rel (%p97) target = $region57
    $region56: #{tpu_custom_call.1} parent=1 // pred_region
      %v100 = vld [vmem:[#allocation9] sm:$0xff]
      %v101 = vld [vmem:[#allocation12] sm:$0xff]
      %v102 = vld [vmem:[#allocation12 + $0x8] sm:$0xff]
      %v103 = vld [vmem:[#allocation12 + $0x10] sm:$0xff]
      %v104 = vld [vmem:[#allocation12 + $0x18] sm:$0xff]
      %v105 = vld [vmem:[%s5] sm:$0x1]
      %v107 = vlaneseq
      %v108 = vshrl.u32 %v107, 7
      %v109 = vsub.s32 0, %v108
      %v110 = vrot.slane %v105, %v109
      %vm112 = vcmask 261120
      %v114 = vsel %vm112, %v100, 0
      %116 = vmatprep.subr.mxu0 0.0
      %117 = vmatpush1.msra.mxu0 %v101
      %118 = vmatprep.subr.mxu0 0.0
      %119 = vmatpush1.msra.mxu0 %v102
      %120 = vmatprep.subr.mxu0 0.0
      %121 = vmatpush1.msra.mxu0 %v103
      %122 = vmatprep.subr.mxu0 0.0
      %123 = vmatpush1.msra.mxu0 %v104
      %124 = vmatprep.subr.mxu0 0.0
      %125 = vmatpush1.msra.mxu0 0.0
      %126 = vmatprep.subr.mxu0 0.0
      %127 = vmatpush1.msra.mxu0 0.0
      %128 = vmatprep.subr.mxu0 0.0
      %129 = vmatpush1.msra.mxu0 0.0
      %130 = vmatprep.subr.mxu0 0.0
      %131 = vmatpush1.msra.mxu0 0.0
      %132 = vmatprep.subr.mxu0 0.0
      %133 = vmatpush1.msra.mxu0 0.0
      %134 = vmatprep.subr.mxu0 0.0
      %135 = vmatpush1.msra.mxu0 0.0
      %136 = vmatprep.subr.mxu0 0.0
      %137 = vmatpush1.msra.mxu0 0.0
      %138 = vmatprep.subr.mxu0 0.0
      %139 = vmatpush1.msra.mxu0 0.0
      %140 = vmatprep.subr.mxu0 0.0
      %141 = vmatpush1.msra.mxu0 0.0
      %142 = vmatprep.subr.mxu0 0.0
      %143 = vmatpush1.msra.mxu0 0.0
      %144 = vmatprep.subr.mxu0 0.0
      %145 = vmatpush1.msra.mxu0 0.0
      %146 = vmatprep.subr.mxu0 0.0
      %147 = vmatpush1.msra.mxu0 0.0
      %148 = vmatprep.subr.mxu0 0.0
      %149 = vmatpush1.msra.mxu0 0.0
      %150 = vmatprep.subr.mxu0 0.0
      %151 = vmatpush1.msra.mxu0 0.0
      %152 = vmatprep.subr.mxu0 0.0
      %153 = vmatpush1.msra.mxu0 0.0
      %154 = vmatprep.subr.mxu0 0.0
      %155 = vmatpush1.msra.mxu0 0.0
      %156 = vmatprep.subr.mxu0 0.0
      %157 = vmatpush1.msra.mxu0 0.0
      %158 = vmatprep.subr.mxu0 0.0
      %159 = vmatpush1.msra.mxu0 0.0
      %160 = vmatprep.subr.mxu0 0.0
      %161 = vmatpush1.msra.mxu0 0.0
      %162 = vmatprep.subr.mxu0 0.0
      %163 = vmatpush1.msra.mxu0 0.0
      %164 = vmatprep.subr.mxu0 0.0
      %165 = vmatpush1.msra.mxu0 0.0
      %166 = vmatprep.subr.mxu0 0.0
      %167 = vmatpush1.msra.mxu0 0.0
      %168 = vmatprep.subr.mxu0 0.0
      %169 = vmatpush1.msra.mxu0 0.0
      %170 = vmatprep.subr.mxu0 0.0
      %171 = vmatpush1.msra.mxu0 0.0
      %172 = vmatprep.subr.mxu0 0.0
      %173 = vmatpush1.msra.mxu0 0.0
      %174 = vmatprep.subr.mxu0 0.0
      %175 = vmatpush1.msra.mxu0 0.0
      %176 = vmatprep.subr.mxu0 0.0
      %177 = vmatpush1.msra.mxu0 0.0
      %178 = vmatprep.subr.mxu0 0.0
      %179 = vmatpush1.msra.mxu0 0.0
      %180 = vmatprep.mubr.f32.mxu0 0.0
      %181 = vmatmul.mubr.f32.gmra.mrb[0].mxu0 %v114
      %v182 = vpop.f32.mrb[0].mxu0
      %v183 = vadd.f32 %v110, %v182
      %v184 = vpop.f32.mrb[0].mxu0
      %185 = vdwg.mxu0
      %186 = vst.msk [vmem:[#allocation2] sm:$0xff] %vm112, %v183
      %v187 = vld [vmem:[%s7] sm:$0xff]
      %v188 = vld [vmem:[%s7 + $0x8] sm:$0xff]
      %v189 = vld [vmem:[%s7 + $0x10] sm:$0xff]
      %v190 = vld [vmem:[%s7 + $0x18] sm:$0xff]
      %191 = vmatprep.subr.mxu0 0.0
      %192 = vmatpush1.msra.mxu0 %v187
      %193 = vmatprep.subr.mxu0 0.0
      %194 = vmatpush1.msra.mxu0 %v188
      %195 = vmatprep.subr.mxu0 0.0
      %196 = vmatpush1.msra.mxu0 %v189
      %197 = vmatprep.subr.mxu0 0.0
      %198 = vmatpush1.msra.mxu0 %v190
      %199 = vmatprep.subr.mxu0 0.0
      %200 = vmatpush1.msra.mxu0 0.0
      %201 = vmatprep.subr.mxu0 0.0
      %202 = vmatpush1.msra.mxu0 0.0
      %203 = vmatprep.subr.mxu0 0.0
      %204 = vmatpush1.msra.mxu0 0.0
      %205 = vmatprep.subr.mxu0 0.0
      %206 = vmatpush1.msra.mxu0 0.0
      %207 = vmatprep.subr.mxu0 0.0
      %208 = vmatpush1.msra.mxu0 0.0
      %209 = vmatprep.subr.mxu0 0.0
      %210 = vmatpush1.msra.mxu0 0.0
      %211 = vmatprep.subr.mxu0 0.0
      %212 = vmatpush1.msra.mxu0 0.0
      %213 = vmatprep.subr.mxu0 0.0
      %214 = vmatpush1.msra.mxu0 0.0
      %215 = vmatprep.subr.mxu0 0.0
      %216 = vmatpush1.msra.mxu0 0.0
      %217 = vmatprep.subr.mxu0 0.0
      %218 = vmatpush1.msra.mxu0 0.0
      %219 = vmatprep.subr.mxu0 0.0
      %220 = vmatpush1.msra.mxu0 0.0
      %221 = vmatprep.subr.mxu0 0.0
      %222 = vmatpush1.msra.mxu0 0.0
      %223 = vmatprep.subr.mxu0 0.0
      %224 = vmatpush1.msra.mxu0 0.0
      %225 = vmatprep.subr.mxu0 0.0
      %226 = vmatpush1.msra.mxu0 0.0
      %227 = vmatprep.subr.mxu0 0.0
      %228 = vmatpush1.msra.mxu0 0.0
      %229 = vmatprep.subr.mxu0 0.0
      %230 = vmatpush1.msra.mxu0 0.0
      %231 = vmatprep.subr.mxu0 0.0
      %232 = vmatpush1.msra.mxu0 0.0
      %233 = vmatprep.subr.mxu0 0.0
      %234 = vmatpush1.msra.mxu0 0.0
      %235 = vmatprep.subr.mxu0 0.0
      %236 = vmatpush1.msra.mxu0 0.0
      %237 = vmatprep.subr.mxu0 0.0
      %238 = vmatpush1.msra.mxu0 0.0
      %239 = vmatprep.subr.mxu0 0.0
      %240 = vmatpush1.msra.mxu0 0.0
      %241 = vmatprep.subr.mxu0 0.0
      %242 = vmatpush1.msra.mxu0 0.0
      %243 = vmatprep.subr.mxu0 0.0
      %244 = vmatpush1.msra.mxu0 0.0
      %245 = vmatprep.subr.mxu0 0.0
      %246 = vmatpush1.msra.mxu0 0.0
      %247 = vmatprep.subr.mxu0 0.0
      %248 = vmatpush1.msra.mxu0 0.0
      %249 = vmatprep.subr.mxu0 0.0
      %250 = vmatpush1.msra.mxu0 0.0
      %251 = vmatprep.subr.mxu0 0.0
      %252 = vmatpush1.msra.mxu0 0.0
      %253 = vmatprep.subr.mxu0 0.0
      %254 = vmatpush1.msra.mxu0 0.0
      %255 = vmatprep.mubr.f32.mxu0 0.0
      %256 = vmatmul.mubr.f32.gmra.mrb[0].mxu0 %v114
      %v257 = vpop.f32.mrb[0].mxu0
      %v258 = vadd.f32 0.0, %v257
      %v259 = vpop.f32.mrb[0].mxu0
      %260 = vdwg.mxu0
      %261 = vst.msk [vmem:[#allocation3] sm:$0xff] %vm112, %v258
      %262 = vst.msk [vmem:[#allocation4] sm:$0xff] %vm112, 0.0
      %263 = vst.msk [vmem:[#allocation5] sm:$0xff] %vm112, 0.0
    $region57: #{tpu_custom_call.1} parent=1 // pred_fallthru
      _
    %v264 = vld [vmem:[#allocation6] sm:$0xff]
    %v265 = vld [vmem:[#allocation6 + $0x8] sm:$0xff]
    %v266 = vld [vmem:[#allocation6 + $0x10] sm:$0xff]
    %v267 = vld [vmem:[#allocation6 + $0x18] sm:$0xff]
    %v268 = vld [vmem:[#allocation6 + $0x20] sm:$0xff]
    %v269 = vld [vmem:[#allocation6 + $0x28] sm:$0xff]
    %v270 = vld [vmem:[#allocation6 + $0x30] sm:$0xff]
    %v271 = vld [vmem:[#allocation6 + $0x38] sm:$0xff]
    %v272 = vld [vmem:[#allocation11] sm:$0xff]
    %v273 = vld [vmem:[#allocation11 + $0x8] sm:$0xff]
    %v274 = vld [vmem:[#allocation11 + $0x10] sm:$0xff]
    %v275 = vld [vmem:[#allocation11 + $0x18] sm:$0xff]
    %vm276 = vcmask 261120
    %v278 = vsel %vm276, %v264, 0
    %v281 = vsel %vm276, %v265, 0
    %v284 = vsel %vm276, %v266, 0
    %v287 = vsel %vm276, %v267, 0
    %v290 = vsel %vm276, %v268, 0
    %v293 = vsel %vm276, %v269, 0
    %v296 = vsel %vm276, %v270, 0
    %v299 = vsel %vm276, %v271, 0
    %301 = vmatprep.subr.mxu0 0.0
    %302 = vmatpush1.msra.mxu0 %v272
    %303 = vmatprep.subr.mxu0 0.0
    %304 = vmatpush1.msra.mxu0 %v273
    %305 = vmatprep.subr.mxu0 0.0
    %306 = vmatpush1.msra.mxu0 %v274
    %307 = vmatprep.subr.mxu0 0.0
    %308 = vmatpush1.msra.mxu0 %v275
    %309 = vmatprep.subr.mxu0 0.0
    %310 = vmatpush1.msra.mxu0 0.0
    %311 = vmatprep.subr.mxu0 0.0
    %312 = vmatpush1.msra.mxu0 0.0
    %313 = vmatprep.subr.mxu0 0.0
    %314 = vmatpush1.msra.mxu0 0.0
    %315 = vmatprep.subr.mxu0 0.0
    %316 = vmatpush1.msra.mxu0 0.0
    %317 = vmatprep.subr.mxu0 0.0
    %318 = vmatpush1.msra.mxu0 0.0
    %319 = vmatprep.subr.mxu0 0.0
    %320 = vmatpush1.msra.mxu0 0.0
    %321 = vmatprep.subr.mxu0 0.0
    %322 = vmatpush1.msra.mxu0 0.0
    %323 = vmatprep.subr.mxu0 0.0
    %324 = vmatpush1.msra.mxu0 0.0
    %325 = vmatprep.subr.mxu0 0.0
    %326 = vmatpush1.msra.mxu0 0.0
    %327 = vmatprep.subr.mxu0 0.0
    %328 = vmatpush1.msra.mxu0 0.0
    %329 = vmatprep.subr.mxu0 0.0
    %330 = vmatpush1.msra.mxu0 0.0
    %331 = vmatprep.subr.mxu0 0.0
    %332 = vmatpush1.msra.mxu0 0.0
    %333 = vmatprep.subr.mxu0 0.0
    %334 = vmatpush1.msra.mxu0 0.0
    %335 = vmatprep.subr.mxu0 0.0
    %336 = vmatpush1.msra.mxu0 0.0
    %337 = vmatprep.subr.mxu0 0.0
    %338 = vmatpush1.msra.mxu0 0.0
    %339 = vmatprep.subr.mxu0 0.0
    %340 = vmatpush1.msra.mxu0 0.0
    %341 = vmatprep.subr.mxu0 0.0
    %342 = vmatpush1.msra.mxu0 0.0
    %343 = vmatprep.subr.mxu0 0.0
    %344 = vmatpush1.msra.mxu0 0.0
    %345 = vmatprep.subr.mxu0 0.0
    %346 = vmatpush1.msra.mxu0 0.0
    %347 = vmatprep.subr.mxu0 0.0
    %348 = vmatpush1.msra.mxu0 0.0
    %349 = vmatprep.subr.mxu0 0.0
    %350 = vmatpush1.msra.mxu0 0.0
    %351 = vmatprep.subr.mxu0 0.0
    %352 = vmatpush1.msra.mxu0 0.0
    %353 = vmatprep.subr.mxu0 0.0
    %354 = vmatpush1.msra.mxu0 0.0
    %355 = vmatprep.subr.mxu0 0.0
    %356 = vmatpush1.msra.mxu0 0.0
    %357 = vmatprep.subr.mxu0 0.0
    %358 = vmatpush1.msra.mxu0 0.0
    %359 = vmatprep.subr.mxu0 0.0
    %360 = vmatpush1.msra.mxu0 0.0
    %361 = vmatprep.subr.mxu0 0.0
    %362 = vmatpush1.msra.mxu0 0.0
    %363 = vmatprep.subr.mxu0 0.0
    %364 = vmatpush1.msra.mxu0 0.0
    %365 = vmatprep.mubr.f32.mxu0 0.0
    %366 = vmatmul.mubr.f32.gmra.mrb[0].mxu0 %v278
    %v367 = vpop.f32.mrb[0].mxu0
    %v368 = vadd.f32 0.0, %v367
    %v369 = vpop.f32.mrb[0].mxu0
    %370 = vmatprep.mubr.f32.mxu0 0.0
    %371 = vmatmul.mubr.f32.gmra.mrb[0].mxu0 %v281
    %v372 = vpop.f32.mrb[0].mxu0
    %v373 = vadd.f32 0.0, %v372
    %v374 = vpop.f32.mrb[0].mxu0
    %375 = vmatprep.mubr.f32.mxu0 0.0
    %376 = vmatmul.mubr.f32.gmra.mrb[0].mxu0 %v284
    %v377 = vpop.f32.mrb[0].mxu0
    %v378 = vadd.f32 0.0, %v377
    %v379 = vpop.f32.mrb[0].mxu0
    %380 = vmatprep.mubr.f32.mxu0 0.0
    %381 = vmatmul.mubr.f32.gmra.mrb[0].mxu0 %v287
    %v382 = vpop.f32.mrb[0].mxu0
    %v383 = vadd.f32 0.0, %v382
    %v384 = vpop.f32.mrb[0].mxu0
    %385 = vmatprep.mubr.f32.mxu0 0.0
    %386 = vmatmul.mubr.f32.gmra.mrb[0].mxu0 %v290
    %v387 = vpop.f32.mrb[0].mxu0
    %v388 = vadd.f32 0.0, %v387
    %v389 = vpop.f32.mrb[0].mxu0
    %390 = vmatprep.mubr.f32.mxu0 0.0
    %391 = vmatmul.mubr.f32.gmra.mrb[0].mxu0 %v293
    %v392 = vpop.f32.mrb[0].mxu0
    %v393 = vadd.f32 0.0, %v392
    %v394 = vpop.f32.mrb[0].mxu0
    %395 = vmatprep.mubr.f32.mxu0 0.0
    %396 = vmatmul.mubr.f32.gmra.mrb[0].mxu0 %v296
    %v397 = vpop.f32.mrb[0].mxu0
    %v398 = vadd.f32 0.0, %v397
    %v399 = vpop.f32.mrb[0].mxu0
    %400 = vmatprep.mubr.f32.mxu0 0.0
    %401 = vmatmul.mubr.f32.gmra.mrb[0].mxu0 %v299
    %v402 = vpop.f32.mrb[0].mxu0
    %v403 = vadd.f32 0.0, %v402
    %v404 = vpop.f32.mrb[0].mxu0
    %405 = vdwg.mxu0
    %v406 = vld [vmem:[#allocation2] sm:$0xff]
    %v408 = vcombine.high %v406, %v406
    %v410 = vunpack.c.l.s4 1966171168
    %v411 = vunpack.c.0.s8 %v410
    %v412 = vlaneseq
    %v413 = vshrl.u32 %v412, 7
    %v414 = vsub.s32 %v411, %v413
    %v415 = vrot.slane %v406, %v414
    %v417 = vunpack.c.l.s4 1966171168
    %v418 = vunpack.c.0.s8 %v417
    %v419 = vlaneseq
    %v420 = vshrl.u32 %v419, 7
    %v421 = vsub.s32 %v418, %v420
    %v422 = vrot.slane %v408, %v421
    %v423 = vcombine.high %v415, %v415
    %v424 = vcombine.high %v422, %v422
    %v426 = vunpack.c.l.s4 1966171168
    %v427 = vunpack.c.0.s8 %v426
    %v428 = vlaneseq
    %v429 = vshrl.u32 %v428, 7
    %v430 = vsub.s32 %v427, %v429
    %v431 = vrot.slane %v415, %v430
    %v433 = vunpack.c.l.s4 1966171168
    %v434 = vunpack.c.0.s8 %v433
    %v435 = vlaneseq
    %v436 = vshrl.u32 %v435, 7
    %v437 = vsub.s32 %v434, %v436
    %v438 = vrot.slane %v422, %v437
    %v440 = vunpack.c.l.s4 1966171168
    %v441 = vunpack.c.0.s8 %v440
    %v442 = vlaneseq
    %v443 = vshrl.u32 %v442, 7
    %v444 = vsub.s32 %v441, %v443
    %v445 = vrot.slane %v423, %v444
    %v447 = vunpack.c.l.s4 1966171168
    %v448 = vunpack.c.0.s8 %v447
    %v449 = vlaneseq
    %v450 = vshrl.u32 %v449, 7
    %v451 = vsub.s32 %v448, %v450
    %v452 = vrot.slane %v424, %v451
    %v453 = vcombine.high %v431, %v431
    %v454 = vcombine.high %v438, %v438
    %v455 = vcombine.high %v445, %v445
    %v456 = vcombine.high %v452, %v452
    %v457 = vlaneseq
    %v458 = vshrl.u32 %v457, 7
    %v459 = vsub.s32 0, %v458
    %v460 = vrot.slane %v431, %v459
    %v461 = vlaneseq
    %v462 = vshrl.u32 %v461, 7
    %v463 = vsub.s32 0, %v462
    %v464 = vrot.slane %v445, %v463
    %v465 = vlaneseq
    %v466 = vshrl.u32 %v465, 7
    %v467 = vsub.s32 0, %v466
    %v468 = vrot.slane %v453, %v467
    %v469 = vlaneseq
    %v470 = vshrl.u32 %v469, 7
    %v471 = vsub.s32 0, %v470
    %v472 = vrot.slane %v455, %v471
    %v473 = vlaneseq
    %v474 = vshrl.u32 %v473, 7
    %v475 = vsub.s32 0, %v474
    %v476 = vrot.slane %v438, %v475
    %v477 = vlaneseq
    %v478 = vshrl.u32 %v477, 7
    %v479 = vsub.s32 0, %v478
    %v480 = vrot.slane %v452, %v479
    %v481 = vlaneseq
    %v482 = vshrl.u32 %v481, 7
    %v483 = vsub.s32 0, %v482
    %v484 = vrot.slane %v454, %v483
    %v485 = vlaneseq
    %v486 = vshrl.u32 %v485, 7
    %v487 = vsub.s32 0, %v486
    %v488 = vrot.slane %v456, %v487
    %v497 = vadd.f32 %v368, %v460
    %v498 = vadd.f32 %v373, %v464
    %v499 = vadd.f32 %v378, %v468
    %v500 = vadd.f32 %v383, %v472
    %v501 = vadd.f32 %v388, %v476
    %v502 = vadd.f32 %v393, %v480
    %v503 = vadd.f32 %v398, %v484
    %v504 = vadd.f32 %v403, %v488
    %v505 = vxor.u32 %v497, 2147483648
    %v506 = vxor.u32 %v498, 2147483648
    %v507 = vxor.u32 %v499, 2147483648
    %v508 = vxor.u32 %v500, 2147483648
    %v509 = vxor.u32 %v501, 2147483648
    %v510 = vxor.u32 %v502, 2147483648
    %v511 = vxor.u32 %v503, 2147483648
    %v512 = vxor.u32 %v504, 2147483648
    %v513 = vmul.f32 %v505, 1.442695
    %v514 = vpow.pop %v513
    %v515 = vmul.f32 %v506, 1.442695
    %v516 = vpow.pop %v515
    %v517 = vmul.f32 %v507, 1.442695
    %v518 = vpow.pop %v517
    %v519 = vmul.f32 %v508, 1.442695
    %v520 = vpow.pop %v519
    %v521 = vmul.f32 %v509, 1.442695
    %v522 = vpow.pop %v521
    %v523 = vmul.f32 %v510, 1.442695
    %v524 = vpow.pop %v523
    %v525 = vmul.f32 %v511, 1.442695
    %v526 = vpow.pop %v525
    %v527 = vmul.f32 %v512, 1.442695
    %v528 = vpow.pop %v527
    %v529 = vadd.f32 %v514, 1.0
    %v530 = vadd.f32 %v516, 1.0
    %v531 = vadd.f32 %v518, 1.0
    %v532 = vadd.f32 %v520, 1.0
    %v533 = vadd.f32 %v522, 1.0
    %v534 = vadd.f32 %v524, 1.0
    %v535 = vadd.f32 %v526, 1.0
    %v536 = vadd.f32 %v528, 1.0
    %v537 = vrcp.pop %v529
    %v538 = vmul.f32 1.0, %v537
    %v539 = vrcp.pop %v530
    %v540 = vmul.f32 1.0, %v539
    %v541 = vrcp.pop %v531
    %v542 = vmul.f32 1.0, %v541
    %v543 = vrcp.pop %v532
    %v544 = vmul.f32 1.0, %v543
    %v545 = vrcp.pop %v533
    %v546 = vmul.f32 1.0, %v545
    %v547 = vrcp.pop %v534
    %v548 = vmul.f32 1.0, %v547
    %v549 = vrcp.pop %v535
    %v550 = vmul.f32 1.0, %v549
    %v551 = vrcp.pop %v536
    %v552 = vmul.f32 1.0, %v551
    %v553 = vmul.f32 %v264, %v538
    %v554 = vmul.f32 %v265, %v540
    %v555 = vmul.f32 %v266, %v542
    %v556 = vmul.f32 %v267, %v544
    %v557 = vmul.f32 %v268, %v546
    %v558 = vmul.f32 %v269, %v548
    %v559 = vmul.f32 %v270, %v550
    %v560 = vmul.f32 %v271, %v552
    %v561 = vld [vmem:[#allocation14] sm:$0xff]
    %v562 = vld [vmem:[#allocation14 + $0x8] sm:$0xff]
    %v563 = vld [vmem:[#allocation14 + $0x10] sm:$0xff]
    %v564 = vld [vmem:[#allocation14 + $0x18] sm:$0xff]
    %v566 = vsel %vm276, %v553, 0
    %v569 = vsel %vm276, %v554, 0
    %v572 = vsel %vm276, %v555, 0
    %v575 = vsel %vm276, %v556, 0
    %v578 = vsel %vm276, %v557, 0
    %v581 = vsel %vm276, %v558, 0
    %v584 = vsel %vm276, %v559, 0
    %v587 = vsel %vm276, %v560, 0
    %589 = vmatprep.subr.mxu0 0.0
    %590 = vmatpush1.msra.mxu0 %v561
    %591 = vmatprep.subr.mxu0 0.0
    %592 = vmatpush1.msra.mxu0 %v562
    %593 = vmatprep.subr.mxu0 0.0
    %594 = vmatpush1.msra.mxu0 %v563
    %595 = vmatprep.subr.mxu0 0.0
    %596 = vmatpush1.msra.mxu0 %v564
    %597 = vmatprep.subr.mxu0 0.0
    %598 = vmatpush1.msra.mxu0 0.0
    %599 = vmatprep.subr.mxu0 0.0
    %600 = vmatpush1.msra.mxu0 0.0
    %601 = vmatprep.subr.mxu0 0.0
    %602 = vmatpush1.msra.mxu0 0.0
    %603 = vmatprep.subr.mxu0 0.0
    %604 = vmatpush1.msra.mxu0 0.0
    %605 = vmatprep.subr.mxu0 0.0
    %606 = vmatpush1.msra.mxu0 0.0
    %607 = vmatprep.subr.mxu0 0.0
    %608 = vmatpush1.msra.mxu0 0.0
    %609 = vmatprep.subr.mxu0 0.0
    %610 = vmatpush1.msra.mxu0 0.0
    %611 = vmatprep.subr.mxu0 0.0
    %612 = vmatpush1.msra.mxu0 0.0
    %613 = vmatprep.subr.mxu0 0.0
    %614 = vmatpush1.msra.mxu0 0.0
    %615 = vmatprep.subr.mxu0 0.0
    %616 = vmatpush1.msra.mxu0 0.0
    %617 = vmatprep.subr.mxu0 0.0
    %618 = vmatpush1.msra.mxu0 0.0
    %619 = vmatprep.subr.mxu0 0.0
    %620 = vmatpush1.msra.mxu0 0.0
    %621 = vmatprep.subr.mxu0 0.0
    %622 = vmatpush1.msra.mxu0 0.0
    %623 = vmatprep.subr.mxu0 0.0
    %624 = vmatpush1.msra.mxu0 0.0
    %625 = vmatprep.subr.mxu0 0.0
    %626 = vmatpush1.msra.mxu0 0.0
    %627 = vmatprep.subr.mxu0 0.0
    %628 = vmatpush1.msra.mxu0 0.0
    %629 = vmatprep.subr.mxu0 0.0
    %630 = vmatpush1.msra.mxu0 0.0
    %631 = vmatprep.subr.mxu0 0.0
    %632 = vmatpush1.msra.mxu0 0.0
    %633 = vmatprep.subr.mxu0 0.0
    %634 = vmatpush1.msra.mxu0 0.0
    %635 = vmatprep.subr.mxu0 0.0
    %636 = vmatpush1.msra.mxu0 0.0
    %637 = vmatprep.subr.mxu0 0.0
    %638 = vmatpush1.msra.mxu0 0.0
    %639 = vmatprep.subr.mxu0 0.0
    %640 = vmatpush1.msra.mxu0 0.0
    %641 = vmatprep.subr.mxu0 0.0
    %642 = vmatpush1.msra.mxu0 0.0
    %643 = vmatprep.subr.mxu0 0.0
    %644 = vmatpush1.msra.mxu0 0.0
    %645 = vmatprep.subr.mxu0 0.0
    %646 = vmatpush1.msra.mxu0 0.0
    %647 = vmatprep.subr.mxu0 0.0
    %648 = vmatpush1.msra.mxu0 0.0
    %649 = vmatprep.subr.mxu0 0.0
    %650 = vmatpush1.msra.mxu0 0.0
    %651 = vmatprep.subr.mxu0 0.0
    %652 = vmatpush1.msra.mxu0 0.0
    %653 = vmatprep.mubr.f32.mxu0 0.0
    %654 = vmatmul.mubr.f32.gmra.mrb[0].mxu0 %v566
    %v655 = vpop.f32.mrb[0].mxu0
    %v656 = vadd.f32 0.0, %v655
    %v657 = vpop.f32.mrb[0].mxu0
    %658 = vmatprep.mubr.f32.mxu0 0.0
    %659 = vmatmul.mubr.f32.gmra.mrb[0].mxu0 %v569
    %v660 = vpop.f32.mrb[0].mxu0
    %v661 = vadd.f32 0.0, %v660
    %v662 = vpop.f32.mrb[0].mxu0
    %663 = vmatprep.mubr.f32.mxu0 0.0
    %664 = vmatmul.mubr.f32.gmra.mrb[0].mxu0 %v572
    %v665 = vpop.f32.mrb[0].mxu0
    %v666 = vadd.f32 0.0, %v665
    %v667 = vpop.f32.mrb[0].mxu0
    %668 = vmatprep.mubr.f32.mxu0 0.0
    %669 = vmatmul.mubr.f32.gmra.mrb[0].mxu0 %v575
    %v670 = vpop.f32.mrb[0].mxu0
    %v671 = vadd.f32 0.0, %v670
    %v672 = vpop.f32.mrb[0].mxu0
    %673 = vmatprep.mubr.f32.mxu0 0.0
    %674 = vmatmul.mubr.f32.gmra.mrb[0].mxu0 %v578
    %v675 = vpop.f32.mrb[0].mxu0
    %v676 = vadd.f32 0.0, %v675
    %v677 = vpop.f32.mrb[0].mxu0
    %678 = vmatprep.mubr.f32.mxu0 0.0
    %679 = vmatmul.mubr.f32.gmra.mrb[0].mxu0 %v581
    %v680 = vpop.f32.mrb[0].mxu0
    %v681 = vadd.f32 0.0, %v680
    %v682 = vpop.f32.mrb[0].mxu0
    %683 = vmatprep.mubr.f32.mxu0 0.0
    %684 = vmatmul.mubr.f32.gmra.mrb[0].mxu0 %v584
    %v685 = vpop.f32.mrb[0].mxu0
    %v686 = vadd.f32 0.0, %v685
    %v687 = vpop.f32.mrb[0].mxu0
    %688 = vmatprep.mubr.f32.mxu0 0.0
    %689 = vmatmul.mubr.f32.gmra.mrb[0].mxu0 %v587
    %v690 = vpop.f32.mrb[0].mxu0
    %v691 = vadd.f32 0.0, %v690
    %v692 = vpop.f32.mrb[0].mxu0
    %693 = vdwg.mxu0
    %v694 = vld [vmem:[#allocation3] sm:$0xff]
    %v696 = vcombine.high %v694, %v694
    %v698 = vunpack.c.l.s4 1966171168
    %v699 = vunpack.c.0.s8 %v698
    %v700 = vlaneseq
    %v701 = vshrl.u32 %v700, 7
    %v702 = vsub.s32 %v699, %v701
    %v703 = vrot.slane %v694, %v702
    %v705 = vunpack.c.l.s4 1966171168
    %v706 = vunpack.c.0.s8 %v705
    %v707 = vlaneseq
    %v708 = vshrl.u32 %v707, 7
    %v709 = vsub.s32 %v706, %v708
    %v710 = vrot.slane %v696, %v709
    %v711 = vcombine.high %v703, %v703
    %v712 = vcombine.high %v710, %v710
    %v714 = vunpack.c.l.s4 1966171168
    %v715 = vunpack.c.0.s8 %v714
    %v716 = vlaneseq
    %v717 = vshrl.u32 %v716, 7
    %v718 = vsub.s32 %v715, %v717
    %v719 = vrot.slane %v703, %v718
    %v721 = vunpack.c.l.s4 1966171168
    %v722 = vunpack.c.0.s8 %v721
    %v723 = vlaneseq
    %v724 = vshrl.u32 %v723, 7
    %v725 = vsub.s32 %v722, %v724
    %v726 = vrot.slane %v710, %v725
    %v728 = vunpack.c.l.s4 1966171168
    %v729 = vunpack.c.0.s8 %v728
    %v730 = vlaneseq
    %v731 = vshrl.u32 %v730, 7
    %v732 = vsub.s32 %v729, %v731
    %v733 = vrot.slane %v711, %v732
    %v735 = vunpack.c.l.s4 1966171168
    %v736 = vunpack.c.0.s8 %v735
    %v737 = vlaneseq
    %v738 = vshrl.u32 %v737, 7
    %v739 = vsub.s32 %v736, %v738
    %v740 = vrot.slane %v712, %v739
    %v741 = vcombine.high %v719, %v719
    %v742 = vcombine.high %v726, %v726
    %v743 = vcombine.high %v733, %v733
    %v744 = vcombine.high %v740, %v740
    %v745 = vlaneseq
    %v746 = vshrl.u32 %v745, 7
    %v747 = vsub.s32 0, %v746
    %v748 = vrot.slane %v719, %v747
    %v749 = vlaneseq
    %v750 = vshrl.u32 %v749, 7
    %v751 = vsub.s32 0, %v750
    %v752 = vrot.slane %v733, %v751
    %v753 = vlaneseq
    %v754 = vshrl.u32 %v753, 7
    %v755 = vsub.s32 0, %v754
    %v756 = vrot.slane %v741, %v755
    %v757 = vlaneseq
    %v758 = vshrl.u32 %v757, 7
    %v759 = vsub.s32 0, %v758
    %v760 = vrot.slane %v743, %v759
    %v761 = vlaneseq
    %v762 = vshrl.u32 %v761, 7
    %v763 = vsub.s32 0, %v762
    %v764 = vrot.slane %v726, %v763
    %v765 = vlaneseq
    %v766 = vshrl.u32 %v765, 7
    %v767 = vsub.s32 0, %v766
    %v768 = vrot.slane %v740, %v767
    %v769 = vlaneseq
    %v770 = vshrl.u32 %v769, 7
    %v771 = vsub.s32 0, %v770
    %v772 = vrot.slane %v742, %v771
    %v773 = vlaneseq
    %v774 = vshrl.u32 %v773, 7
    %v775 = vsub.s32 0, %v774
    %v776 = vrot.slane %v744, %v775
    %v785 = vadd.f32 %v656, %v748
    %v786 = vadd.f32 %v661, %v752
    %v787 = vadd.f32 %v666, %v756
    %v788 = vadd.f32 %v671, %v760
    %v789 = vadd.f32 %v676, %v764
    %v790 = vadd.f32 %v681, %v768
    %v791 = vadd.f32 %v686, %v772
    %v792 = vadd.f32 %v691, %v776
    %v793 = vxor.u32 %v785, 2147483648
    %v794 = vxor.u32 %v786, 2147483648
    %v795 = vxor.u32 %v787, 2147483648
    %v796 = vxor.u32 %v788, 2147483648
    %v797 = vxor.u32 %v789, 2147483648
    %v798 = vxor.u32 %v790, 2147483648
    %v799 = vxor.u32 %v791, 2147483648
    %v800 = vxor.u32 %v792, 2147483648
    %v801 = vmul.f32 %v793, 1.442695
    %v802 = vpow.pop %v801
    %v803 = vmul.f32 %v794, 1.442695
    %v804 = vpow.pop %v803
    %v805 = vmul.f32 %v795, 1.442695
    %v806 = vpow.pop %v805
    %v807 = vmul.f32 %v796, 1.442695
    %v808 = vpow.pop %v807
    %v809 = vmul.f32 %v797, 1.442695
    %v810 = vpow.pop %v809
    %v811 = vmul.f32 %v798, 1.442695
    %v812 = vpow.pop %v811
    %v813 = vmul.f32 %v799, 1.442695
    %v814 = vpow.pop %v813
    %v815 = vmul.f32 %v800, 1.442695
    %v816 = vpow.pop %v815
    %v817 = vadd.f32 %v802, 1.0
    %v818 = vadd.f32 %v804, 1.0
    %v819 = vadd.f32 %v806, 1.0
    %v820 = vadd.f32 %v808, 1.0
    %v821 = vadd.f32 %v810, 1.0
    %v822 = vadd.f32 %v812, 1.0
    %v823 = vadd.f32 %v814, 1.0
    %v824 = vadd.f32 %v816, 1.0
    %v825 = vrcp.pop %v817
    %v826 = vmul.f32 1.0, %v825
    %v827 = vrcp.pop %v818
    %v828 = vmul.f32 1.0, %v827
    %v829 = vrcp.pop %v819
    %v830 = vmul.f32 1.0, %v829
    %v831 = vrcp.pop %v820
    %v832 = vmul.f32 1.0, %v831
    %v833 = vrcp.pop %v821
    %v834 = vmul.f32 1.0, %v833
    %v835 = vrcp.pop %v822
    %v836 = vmul.f32 1.0, %v835
    %v837 = vrcp.pop %v823
    %v838 = vmul.f32 1.0, %v837
    %v839 = vrcp.pop %v824
    %v840 = vmul.f32 1.0, %v839
    %v841 = vmul.f32 %v553, %v826
    %v842 = vmul.f32 %v554, %v828
    %v843 = vmul.f32 %v555, %v830
    %v844 = vmul.f32 %v556, %v832
    %v845 = vmul.f32 %v557, %v834
    %v846 = vmul.f32 %v558, %v836
    %v847 = vmul.f32 %v559, %v838
    %v848 = vmul.f32 %v560, %v840
    %v849 = vld [vmem:[#allocation4] sm:$0xff]
    %v850 = vsel %vm276, %v841, 0.0
    %v851 = vrot.slane %v850, 4
    %v852 = vadd.f32 %v850, %v851
    %v853 = vrot.slane %v852, 2
    %v854 = vadd.f32 %v852, %v853
    %v855 = vrot.slane %v854, 1
    %v856 = vadd.f32 %v854, %v855
    %v857 = vsel %vm276, %v842, 0.0
    %v858 = vrot.slane %v857, 4
    %v859 = vadd.f32 %v857, %v858
    %v860 = vrot.slane %v859, 2
    %v861 = vadd.f32 %v859, %v860
    %v862 = vrot.slane %v861, 1
    %v863 = vadd.f32 %v861, %v862
    %v864 = vsel %vm276, %v843, 0.0
    %v865 = vrot.slane %v864, 4
    %v866 = vadd.f32 %v864, %v865
    %v867 = vrot.slane %v866, 2
    %v868 = vadd.f32 %v866, %v867
    %v869 = vrot.slane %v868, 1
    %v870 = vadd.f32 %v868, %v869
    %v871 = vsel %vm276, %v844, 0.0
    %v872 = vrot.slane %v871, 4
    %v873 = vadd.f32 %v871, %v872
    %v874 = vrot.slane %v873, 2
    %v875 = vadd.f32 %v873, %v874
    %v876 = vrot.slane %v875, 1
    %v877 = vadd.f32 %v875, %v876
    %v878 = vsel %vm276, %v845, 0.0
    %v879 = vrot.slane %v878, 4
    %v880 = vadd.f32 %v878, %v879
    %v881 = vrot.slane %v880, 2
    %v882 = vadd.f32 %v880, %v881
    %v883 = vrot.slane %v882, 1
    %v884 = vadd.f32 %v882, %v883
    %v885 = vsel %vm276, %v846, 0.0
    %v886 = vrot.slane %v885, 4
    %v887 = vadd.f32 %v885, %v886
    %v888 = vrot.slane %v887, 2
    %v889 = vadd.f32 %v887, %v888
    %v890 = vrot.slane %v889, 1
    %v891 = vadd.f32 %v889, %v890
    %v892 = vsel %vm276, %v847, 0.0
    %v893 = vrot.slane %v892, 4
    %v894 = vadd.f32 %v892, %v893
    %v895 = vrot.slane %v894, 2
    %v896 = vadd.f32 %v894, %v895
    %v897 = vrot.slane %v896, 1
    %v898 = vadd.f32 %v896, %v897
    %v899 = vsel %vm276, %v848, 0.0
    %v900 = vrot.slane %v899, 4
    %v901 = vadd.f32 %v899, %v900
    %v902 = vrot.slane %v901, 2
    %v903 = vadd.f32 %v901, %v902
    %v904 = vrot.slane %v903, 1
    %v905 = vadd.f32 %v903, %v904
    %vm914 = vcmask 1041409
    %v915 = vsel %vm914, %v863, %v856
    %vm916 = vcmask 1042434
    %v917 = vsel %vm916, %v870, %v915
    %vm918 = vcmask 1043459
    %v919 = vsel %vm918, %v877, %v917
    %vm920 = vcmask 1044484
    %v921 = vsel %vm920, %v884, %v919
    %vm922 = vcmask 1045509
    %v923 = vsel %vm922, %v891, %v921
    %vm924 = vcmask 1046534
    %v925 = vsel %vm924, %v898, %v923
    %vm926 = vcmask 1047559
    %v927 = vsel %vm926, %v905, %v925
    %v929 = vadd.f32 %v849, %v927
    %930 = vst.msk [vmem:[#allocation4] sm:$0xff] %vm276, %v929
    %v931 = vld [vmem:[#allocation5] sm:$0xff]
    %v932 = vsel %vm276, %v264, 0.0
    %v933 = vrot.slane %v932, 4
    %v934 = vadd.f32 %v932, %v933
    %v935 = vrot.slane %v934, 2
    %v936 = vadd.f32 %v934, %v935
    %v937 = vrot.slane %v936, 1
    %v938 = vadd.f32 %v936, %v937
    %v939 = vsel %vm276, %v265, 0.0
    %v940 = vrot.slane %v939, 4
    %v941 = vadd.f32 %v939, %v940
    %v942 = vrot.slane %v941, 2
    %v943 = vadd.f32 %v941, %v942
    %v944 = vrot.slane %v943, 1
    %v945 = vadd.f32 %v943, %v944
    %v946 = vsel %vm276, %v266, 0.0
    %v947 = vrot.slane %v946, 4
    %v948 = vadd.f32 %v946, %v947
    %v949 = vrot.slane %v948, 2
    %v950 = vadd.f32 %v948, %v949
    %v951 = vrot.slane %v950, 1
    %v952 = vadd.f32 %v950, %v951
    %v953 = vsel %vm276, %v267, 0.0
    %v954 = vrot.slane %v953, 4
    %v955 = vadd.f32 %v953, %v954
    %v956 = vrot.slane %v955, 2
    %v957 = vadd.f32 %v955, %v956
    %v958 = vrot.slane %v957, 1
    %v959 = vadd.f32 %v957, %v958
    %v960 = vsel %vm276, %v268, 0.0
    %v961 = vrot.slane %v960, 4
    %v962 = vadd.f32 %v960, %v961
    %v963 = vrot.slane %v962, 2
    %v964 = vadd.f32 %v962, %v963
    %v965 = vrot.slane %v964, 1
    %v966 = vadd.f32 %v964, %v965
    %v967 = vsel %vm276, %v269, 0.0
    %v968 = vrot.slane %v967, 4
    %v969 = vadd.f32 %v967, %v968
    %v970 = vrot.slane %v969, 2
    %v971 = vadd.f32 %v969, %v970
    %v972 = vrot.slane %v971, 1
    %v973 = vadd.f32 %v971, %v972
    %v974 = vsel %vm276, %v270, 0.0
    %v975 = vrot.slane %v974, 4
    %v976 = vadd.f32 %v974, %v975
    %v977 = vrot.slane %v976, 2
    %v978 = vadd.f32 %v976, %v977
    %v979 = vrot.slane %v978, 1
    %v980 = vadd.f32 %v978, %v979
    %v981 = vsel %vm276, %v271, 0.0
    %v982 = vrot.slane %v981, 4
    %v983 = vadd.f32 %v981, %v982
    %v984 = vrot.slane %v983, 2
    %v985 = vadd.f32 %v983, %v984
    %v986 = vrot.slane %v985, 1
    %v987 = vadd.f32 %v985, %v986
    %v996 = vsel %vm914, %v945, %v938
    %v997 = vsel %vm916, %v952, %v996
    %v998 = vsel %vm918, %v959, %v997
    %v999 = vsel %vm920, %v966, %v998
    %v1000 = vsel %vm922, %v973, %v999
    %v1001 = vsel %vm924, %v980, %v1000
    %v1002 = vsel %vm926, %v987, %v1001
    %v1004 = vadd.f32 %v931, %v1002
    %1005 = vst.msk [vmem:[#allocation5] sm:$0xff] %vm276, %v1004
    // Predicated region
    $region58: #{tpu_custom_call.1} parent=1 // pred_check
      %p1006 = pneg %p96
    $region59: #{tpu_custom_call.1} parent=1 // pred_check_branch
      %1008 = sbr.rel (%p1006) target = $region61
    $region60: #{tpu_custom_call.1} parent=1 // pred_region
      %v1009 = vld [vmem:[%s2] sm:$0xff]
      %v1010 = vadd.f32 %v1009, 1.0
      %v1011 = vrcp.pop %v1010
      %v1012 = vld [vmem:[#allocation9] sm:$0xff]
      %v1013 = vld [vmem:[#allocation4] sm:$0xff]
      %1015 = vset.pattern.permute.xlu0 0
      %1016 = vperm.xlu0 %1015, %v1011
      %v1017 = vpop.permute.xlu0 %1016
      %v1019 = vmul.f32 %v1013, %v1017
      %v1020 = vadd.f32 %v1012, %v1019
      %v1021 = vld [vmem:[#allocation5] sm:$0xff]
      %v1022 = vadd.f32 %v1020, %v1021
      %1023 = vst.msk [vmem:[#allocation15] sm:$0xff] %vm276, %v1022
    $region61: #{tpu_custom_call.1} parent=1 // pred_fallthru
      _
    // Predicated region
    $region62: #{tpu_custom_call.1} parent=1 // pred_check
      _
    $region63: #{tpu_custom_call.1} parent=1 // pred_check_branch
      %1025 = sbr.rel (0) target = $region65
    $region64: #{tpu_custom_call.1} parent=1 // pred_region
      %s1027 = ssub.s32 128, 128
      %1028 = vsyncadd [#allocation8], %s1027
      %s1030 = sshll.u32 [#allocation15], 4
      %s1031 = int_to_ptr.vmem [resolvable:$true] %s1030
      %1033 = dma.vmem_to_hbm [thread:$0]  %s1031, 128, %s8, [#allocation8]
    $region65: #{tpu_custom_call.1} parent=1 // pred_fallthru
      _
    // Predicated region
    $region66: #{tpu_custom_call.1} parent=1 // pred_check
      _
    $region67: #{tpu_custom_call.1} parent=1 // pred_check_branch
      %1035 = sbr.rel (0) target = $region69
    $region68: #{tpu_custom_call.1} parent=1 // pred_region
      %1036 = dma.done [#allocation8], 128
    $region69: #{tpu_custom_call.1} parent=1 // pred_fallthru
      _
    %1037 = vsyncpa [#allocation7], 1
    %1038 = vsyncpa [#allocation10], 1
    %1039 = vsyncpa [#allocation13], 1
    %1040 = vsyncpa [#allocation8], 1

</llo_original>
